<compile_context>
chip_gen: v5e
topology: v5e:2x2
jax: 0.10.0
libtpu: 0.0.40
codegen_flags: <defaults>
</compile_context>

<pallas_src>
import functools

import jax
import jax.numpy as jnp
from jax import lax
from jax.experimental import pallas as pl
from jax.experimental.pallas import tpu as pltpu


def _round_up(n, m):
    return (n + m - 1) // m * m


def _bpnn_kernel(x_ref, w0_ref, b0_ref, wh_ref, bh_ref, wout_ref, bout_ref,
                 logp_ref, *, hiden_size):
    x = x_ref[...].astype(jnp.float32)                       # (TB, F)

    # --- sklearn Normalizer(norm='l2'): row / ||row||_2  (rsqrt * mul, EUP slot) ---
    sq = jnp.sum(x * x, axis=1, keepdims=True)               # (TB, 1)
    inv = jnp.where(sq > 0.0, lax.rsqrt(sq), 1.0)            # zero rows unchanged
    x = x * inv

    # --- input layer: Linear + Sigmoid (bf16 operands, f32 accumulate) ---
    h = jnp.dot(x.astype(jnp.bfloat16), w0_ref[...],
                preferred_element_type=jnp.float32) + b0_ref[...]
    h = jax.nn.sigmoid(h)                                     # (TB, N) f32

    # --- hidden layers: Linear + Sigmoid, hiden_size times ---
    def _layer(i, hc):
        z = jnp.dot(hc.astype(jnp.bfloat16), wh_ref[i],
                    preferred_element_type=jnp.float32) + bh_ref[i]
        return jax.nn.sigmoid(z)

    if hiden_size <= 4:
        for i in range(hiden_size):                           # static unroll, tiny H
            h = _layer(i, h)
    else:
        h = lax.fori_loop(0, hiden_size, _layer, h)           # bounded live ranges

    # --- Dropout: identity at inference ---
    # TODO(synk): training-mode dropout not modeled.

    # --- output layer (padded to O_pad=128 lanes; pad bias = -1e30) ---
    logits = (jnp.dot(h.astype(jnp.bfloat16), wout_ref[...],
                      preferred_element_type=jnp.float32) + bout_ref[...])  # (TB, O_pad)

    # --- LogSoftmax(dim=1); padded columns contribute exp(-1e30 - m) == 0 ---
    m = jnp.max(logits, axis=1, keepdims=True)
    shifted = logits - m
    lse = jnp.log(jnp.sum(jnp.exp(shifted), axis=1, keepdims=True))
    logp_ref[...] = (shifted - lse).astype(logp_ref.dtype)


def bpnn_forward(x, params, hiden_size, *, tile_rows=256):
    """x: (B, input_size) float32. Returns (log_probs (B, O) f32, pred (B,) int32)."""
    w0, b0, wh, bh, wout, bout = params
    B, F = x.shape
    N = w0.shape[1]
    O = wout.shape[1]
    H_alloc = wh.shape[0]
    O_pad = _round_up(O, 128)                                 # lane-dense output

    # bf16 weights (MXU-native, halves VMEM/DMA); f32 biases.
    w0b = w0.astype(jnp.bfloat16)
    whb = wh.astype(jnp.bfloat16)
    woutb = jnp.zeros((N, O_pad), jnp.bfloat16).at[:, :O].set(wout.astype(jnp.bfloat16))
    boutp = jnp.full((1, O_pad), -1e30, jnp.float32).at[:, :O].set(bout.astype(jnp.float32))
    b0f = b0.astype(jnp.float32)
    bhf = bh.astype(jnp.float32)

    # Batch tiling: big tiles amortize per-step overhead; pad B to a tile multiple.
    TB = min(tile_rows, _round_up(B, 8))
    Bp = _round_up(B, TB)
    xp = x if Bp == B else jnp.pad(x, ((0, Bp - B), (0, 0)))
    grid = (Bp // TB,)

    const2 = lambda i: (0, 0)
    const3 = lambda i: (0, 0, 0)

    flops = 2 * Bp * (F * N + hiden_size * N * N + N * O_pad)
    transcendentals = Bp * ((hiden_size + 1) * N + 2 * O_pad)
    bytes_accessed = (Bp * F * 4 + F * N * 2 + N * 4
                      + H_alloc * N * N * 2 + H_alloc * N * 4
                      + N * O_pad * 2 + O_pad * 4 + Bp * O_pad * 4)

    kernel = functools.partial(_bpnn_kernel, hiden_size=hiden_size)

    logp_full = pl.pallas_call(
        kernel,
        out_shape=jax.ShapeDtypeStruct((Bp, O_pad), jnp.float32),
        grid=grid,
        in_specs=[
            pl.BlockSpec((TB, F), lambda i: (i, 0)),          # x: tiled over batch
            pl.BlockSpec(w0b.shape, const2),                  # weights/biases: resident
            pl.BlockSpec(b0f.shape, const2),
            pl.BlockSpec(whb.shape, const3),
            pl.BlockSpec(bhf.shape, const3),
            pl.BlockSpec(woutb.shape, const2),
            pl.BlockSpec(boutp.shape, const2),
        ],
        out_specs=pl.BlockSpec((TB, O_pad), lambda i: (i, 0)),
        compiler_params=pltpu.CompilerParams(
            dimension_semantics=("parallel",),
            vmem_limit_bytes=48 * 1024 * 1024,
        ),
        cost_estimate=pl.CostEstimate(
            flops=flops,
            transcendentals=transcendentals,
            bytes_accessed=bytes_accessed,
        ),
    )(xp, w0b, b0f, whb, bhf, woutb, boutp)

    logp = logp_full[:B, :O]
    pred = jnp.argmax(logp, axis=1).astype(jnp.int32)         # torch.max(predict, 1)[1]
    return logp, pred


def init_params(key, input_size, hiden_size, neuron_size, output_size):
    """nn.Linear-style init: U(-1/sqrt(fan_in), 1/sqrt(fan_in)).
    Weights stored as (in_features, out_features); biases (1, out) / (H, 1, out)."""
    ks = jax.random.split(key, 6)

    def lin(kw, kb, fan_in, fan_out, extra=()):
        bound = 1.0 / jnp.sqrt(jnp.float32(fan_in))
        w = jax.random.uniform(kw, extra + (fan_in, fan_out), jnp.float32, -bound, bound)
        b = jax.random.uniform(kb, extra + (1, fan_out), jnp.float32, -bound, bound)
        return w, b

    w0, b0 = lin(ks[0], ks[1], input_size, neuron_size)
    wh, bh = lin(ks[2], ks[3], neuron_size, neuron_size, extra=(max(hiden_size, 1),))
    wout, bout = lin(ks[4], ks[5], neuron_size, output_size)
    return (w0, b0, wh, bh, wout, bout)


def bpnn_reference(x, params, hiden_size):
    """Pure-JAX reference mirroring the kernel arithmetic (bf16 matmuls, f32 accumulate)."""
    w0, b0, wh, bh, wout, bout = params
    sq = jnp.sum(x * x, axis=1, keepdims=True)
    inv = jnp.where(sq > 0.0, lax.rsqrt(sq), 1.0)
    h = x * inv
    h = jax.nn.sigmoid(jnp.dot(h.astype(jnp.bfloat16), w0.astype(jnp.bfloat16),
                               preferred_element_type=jnp.float32) + b0[0])
    for i in range(hiden_size):
        h = jax.nn.sigmoid(jnp.dot(h.astype(jnp.bfloat16), wh[i].astype(jnp.bfloat16),
                                   preferred_element_type=jnp.float32) + bh[i, 0])
    logits = jnp.dot(h.astype(jnp.bfloat16), wout.astype(jnp.bfloat16),
                     preferred_element_type=jnp.float32) + bout[0]
    logp = jax.nn.log_softmax(logits, axis=1)
    return logp, jnp.argmax(logp, axis=1).astype(jnp.int32)


if __name__ == "__main__":
    # Small shapes consistent with the module's __init__.
    batch = 8
    input_size = 16
    hiden_size = 2
    neuron_size = 32
    output_size = 8

    key = jax.random.PRNGKey(0)
    kx, kp = jax.random.split(key)
    x = jax.random.normal(kx, (batch, input_size), jnp.float32)
    params = init_params(kp, input_size, hiden_size, neuron_size, output_size)

    logp, pred = bpnn_forward(x, params, hiden_size)
    logp, pred = jax.block_until_ready((logp, pred))

    ref_logp, ref_pred = bpnn_reference(x, params, hiden_size)
    assert logp.shape == (batch, output_size)
    assert pred.shape == (batch,)
    assert jnp.allclose(logp, ref_logp, atol=2e-2, rtol=2e-2), "log-prob mismatch"
    assert jnp.array_equal(pred, ref_pred), "argmax mismatch"

    print("KERNEL_OK")
</pallas_src>

<mosaic_0001>
module attributes {stable_mosaic.version = 11 : i64} {
  func.func @_bpnn_kernel(%arg0: i32, %arg1: memref<8x16xf32, #tpu.memory_space<vmem>>, %arg2: memref<16x32xbf16, #tpu.memory_space<vmem>>, %arg3: memref<1x32xf32, #tpu.memory_space<vmem>>, %arg4: memref<2x32x32xbf16, #tpu.memory_space<vmem>>, %arg5: memref<2x1x32xf32, #tpu.memory_space<vmem>>, %arg6: memref<32x128xbf16, #tpu.memory_space<vmem>>, %arg7: memref<1x128xf32, #tpu.memory_space<vmem>>, %arg8: memref<8x128xf32, #tpu.memory_space<vmem>>) attributes {dimension_semantics = [#tpu.dimension_semantics<parallel>], iteration_bounds = array<i64: 1>, scalar_prefetch = 0 : i64, scratch_operands = 0 : i64, tpu.core_type = #tpu.core_type<tc>, window_params = [{transform_indices = @transform_0, window_bounds = array<i64: 8, 16>}, {pipeline_mode = #tpu.pipeline_mode<synchronous>, transform_indices = @transform_1, window_bounds = array<i64: 16, 32>}, {pipeline_mode = #tpu.pipeline_mode<synchronous>, transform_indices = @transform_2, window_bounds = array<i64: 1, 32>}, {pipeline_mode = #tpu.pipeline_mode<synchronous>, transform_indices = @transform_3, window_bounds = array<i64: 2, 32, 32>}, {pipeline_mode = #tpu.pipeline_mode<synchronous>, transform_indices = @transform_4, window_bounds = array<i64: 2, 1, 32>}, {pipeline_mode = #tpu.pipeline_mode<synchronous>, transform_indices = @transform_5, window_bounds = array<i64: 32, 128>}, {pipeline_mode = #tpu.pipeline_mode<synchronous>, transform_indices = @transform_6, window_bounds = array<i64: 1, 128>}, {transform_indices = @transform_7, window_bounds = array<i64: 8, 128>}]} {
    %c0 = arith.constant 0 : index
    %c0_0 = arith.constant 0 : index
    %0 = vector.load %arg1[%c0, %c0_0] : memref<8x16xf32, #tpu.memory_space<vmem>>, vector<8x16xf32>
    %1 = arith.mulf %0, %0 : vector<8x16xf32>
    %cst = arith.constant dense<0.000000e+00> : vector<8xf32>
    %2 = vector.multi_reduction <add>, %1, %cst [1] : vector<8x16xf32> to vector<8xf32>
    %3 = vector.shape_cast %2 : vector<8xf32> to vector<8x1xf32>
    %cst_1 = arith.constant 0.000000e+00 : f32
    %4 = vector.broadcast %cst_1 : f32 to vector<8x1xf32>
    %5 = arith.cmpf ogt, %3, %4 : vector<8x1xf32>
    %6 = math.rsqrt %3 : vector<8x1xf32>
    %cst_2 = arith.constant 1.000000e+00 : f32
    %7 = vector.broadcast %cst_2 : f32 to vector<8x1xf32>
    %8 = arith.select %5, %6, %7 : vector<8x1xi1>, vector<8x1xf32>
    %9 = vector.broadcast %8 : vector<8x1xf32> to vector<8x16xf32>
    %10 = arith.mulf %0, %9 : vector<8x16xf32>
    %11 = arith.truncf %10 : vector<8x16xf32> to vector<8x16xbf16>
    %c0_3 = arith.constant 0 : index
    %c0_4 = arith.constant 0 : index
    %12 = vector.load %arg2[%c0_3, %c0_4] : memref<16x32xbf16, #tpu.memory_space<vmem>>, vector<16x32xbf16>
    %cst_5 = arith.constant dense<0.000000e+00> : vector<8x32xf32>
    %13 = tpu.matmul %11, %12, %cst_5 {dimension_numbers = #tpu.dot_dimension_numbers<[1], [0], [0], [1], [0, 0, 1, 1], [], []>} : vector<8x16xbf16>, vector<16x32xbf16>, vector<8x32xf32> -> vector<8x32xf32>
    %c0_6 = arith.constant 0 : index
    %c0_7 = arith.constant 0 : index
    %14 = vector.load %arg3[%c0_6, %c0_7] : memref<1x32xf32, #tpu.memory_space<vmem>>, vector<1x32xf32>
    %15 = vector.broadcast %14 : vector<1x32xf32> to vector<8x32xf32>
    %16 = arith.addf %13, %15 : vector<8x32xf32>
    %17 = arith.negf %16 : vector<8x32xf32>
    %18 = math.exp %17 : vector<8x32xf32>
    %cst_8 = arith.constant 1.000000e+00 : f32
    %19 = vector.broadcast %cst_8 : f32 to vector<8x32xf32>
    %20 = arith.addf %19, %18 : vector<8x32xf32>
    %21 = arith.divf %19, %20 : vector<8x32xf32>
    %22 = arith.truncf %21 : vector<8x32xf32> to vector<8x32xbf16>
    %c0_9 = arith.constant 0 : index
    %c0_10 = arith.constant 0 : index
    %c0_11 = arith.constant 0 : index
    %23 = vector.load %arg4[%c0_9, %c0_10, %c0_11] : memref<2x32x32xbf16, #tpu.memory_space<vmem>>, vector<1x32x32xbf16>
    %24 = vector.shape_cast %23 : vector<1x32x32xbf16> to vector<32x32xbf16>
    %cst_12 = arith.constant dense<0.000000e+00> : vector<8x32xf32>
    %25 = tpu.matmul %22, %24, %cst_12 {dimension_numbers = #tpu.dot_dimension_numbers<[1], [0], [0], [1], [0, 0, 1, 1], [], []>} : vector<8x32xbf16>, vector<32x32xbf16>, vector<8x32xf32> -> vector<8x32xf32>
    %c0_13 = arith.constant 0 : index
    %c0_14 = arith.constant 0 : index
    %c0_15 = arith.constant 0 : index
    %26 = vector.load %arg5[%c0_13, %c0_14, %c0_15] : memref<2x1x32xf32, #tpu.memory_space<vmem>>, vector<1x1x32xf32>
    %27 = vector.shape_cast %26 : vector<1x1x32xf32> to vector<1x32xf32>
    %28 = vector.broadcast %27 : vector<1x32xf32> to vector<8x32xf32>
    %29 = arith.addf %25, %28 : vector<8x32xf32>
    %30 = arith.negf %29 : vector<8x32xf32>
    %31 = math.exp %30 : vector<8x32xf32>
    %cst_16 = arith.constant 1.000000e+00 : f32
    %32 = vector.broadcast %cst_16 : f32 to vector<8x32xf32>
    %33 = arith.addf %32, %31 : vector<8x32xf32>
    %34 = arith.divf %32, %33 : vector<8x32xf32>
    %35 = arith.truncf %34 : vector<8x32xf32> to vector<8x32xbf16>
    %c1 = arith.constant 1 : index
    %c0_17 = arith.constant 0 : index
    %c0_18 = arith.constant 0 : index
    %36 = vector.load %arg4[%c1, %c0_17, %c0_18] : memref<2x32x32xbf16, #tpu.memory_space<vmem>>, vector<1x32x32xbf16>
    %37 = vector.shape_cast %36 : vector<1x32x32xbf16> to vector<32x32xbf16>
    %cst_19 = arith.constant dense<0.000000e+00> : vector<8x32xf32>
    %38 = tpu.matmul %35, %37, %cst_19 {dimension_numbers = #tpu.dot_dimension_numbers<[1], [0], [0], [1], [0, 0, 1, 1], [], []>} : vector<8x32xbf16>, vector<32x32xbf16>, vector<8x32xf32> -> vector<8x32xf32>
    %c1_20 = arith.constant 1 : index
    %c0_21 = arith.constant 0 : index
    %c0_22 = arith.constant 0 : index
    %39 = vector.load %arg5[%c1_20, %c0_21, %c0_22] : memref<2x1x32xf32, #tpu.memory_space<vmem>>, vector<1x1x32xf32>
    %40 = vector.shape_cast %39 : vector<1x1x32xf32> to vector<1x32xf32>
    %41 = vector.broadcast %40 : vector<1x32xf32> to vector<8x32xf32>
    %42 = arith.addf %38, %41 : vector<8x32xf32>
    %43 = arith.negf %42 : vector<8x32xf32>
    %44 = math.exp %43 : vector<8x32xf32>
    %cst_23 = arith.constant 1.000000e+00 : f32
    %45 = vector.broadcast %cst_23 : f32 to vector<8x32xf32>
    %46 = arith.addf %45, %44 : vector<8x32xf32>
    %47 = arith.divf %45, %46 : vector<8x32xf32>
    %48 = arith.truncf %47 : vector<8x32xf32> to vector<8x32xbf16>
    %c0_24 = arith.constant 0 : index
    %c0_25 = arith.constant 0 : index
    %49 = vector.load %arg6[%c0_24, %c0_25] : memref<32x128xbf16, #tpu.memory_space<vmem>>, vector<32x128xbf16>
    %cst_26 = arith.constant dense<0.000000e+00> : vector<8x128xf32>
    %50 = tpu.matmul %48, %49, %cst_26 {dimension_numbers = #tpu.dot_dimension_numbers<[1], [0], [0], [1], [0, 0, 1, 1], [], []>} : vector<8x32xbf16>, vector<32x128xbf16>, vector<8x128xf32> -> vector<8x128xf32>
    %c0_27 = arith.constant 0 : index
    %c0_28 = arith.constant 0 : index
    %51 = vector.load %arg7[%c0_27, %c0_28] : memref<1x128xf32, #tpu.memory_space<vmem>>, vector<1x128xf32>
    %52 = vector.broadcast %51 : vector<1x128xf32> to vector<8x128xf32>
    %53 = arith.addf %50, %52 : vector<8x128xf32>
    %cst_29 = arith.constant dense<0xFF800000> : vector<8xf32>
    %54 = vector.multi_reduction <maximumf>, %53, %cst_29 [1] : vector<8x128xf32> to vector<8xf32>
    %55 = vector.shape_cast %54 : vector<8xf32> to vector<8x1xf32>
    %56 = vector.broadcast %55 : vector<8x1xf32> to vector<8x128xf32>
    %57 = arith.subf %53, %56 : vector<8x128xf32>
    %58 = math.exp %57 : vector<8x128xf32>
    %cst_30 = arith.constant dense<0.000000e+00> : vector<8xf32>
    %59 = vector.multi_reduction <add>, %58, %cst_30 [1] : vector<8x128xf32> to vector<8xf32>
    %60 = vector.shape_cast %59 : vector<8xf32> to vector<8x1xf32>
    %61 = math.log %60 : vector<8x1xf32>
    %62 = vector.broadcast %61 : vector<8x1xf32> to vector<8x128xf32>
    %63 = arith.subf %57, %62 : vector<8x128xf32>
    %c0_31 = arith.constant 0 : index
    %c0_32 = arith.constant 0 : index
    %64 = vector.load %arg8[%c0_31, %c0_32] : memref<8x128xf32, #tpu.memory_space<vmem>>, vector<8x128xf32>
    tpu.vector_store %arg8[%c0_31, %c0_32], %63 {strides = array<i32>} : memref<8x128xf32, #tpu.memory_space<vmem>>, vector<8x128xf32>,
    return
  }
  func.func @transform_0(%arg0: i32) -> (i32, i32) {
    %c0_i32 = arith.constant 0 : i32
    %c0_i32_0 = arith.constant 0 : i32
    return %arg0, %c0_i32 : i32, i32
  }
  func.func @transform_1(%arg0: i32) -> (i32, i32) {
    %c0_i32 = arith.constant 0 : i32
    %c0_i32_0 = arith.constant 0 : i32
    %c0_i32_1 = arith.constant 0 : i32
    return %c0_i32, %c0_i32_0 : i32, i32
  }
  func.func @transform_2(%arg0: i32) -> (i32, i32) {
    %c0_i32 = arith.constant 0 : i32
    %c0_i32_0 = arith.constant 0 : i32
    %c0_i32_1 = arith.constant 0 : i32
    return %c0_i32, %c0_i32_0 : i32, i32
  }
  func.func @transform_3(%arg0: i32) -> (i32, i32, i32) {
    %c0_i32 = arith.constant 0 : i32
    %c0_i32_0 = arith.constant 0 : i32
    %c0_i32_1 = arith.constant 0 : i32
    %c0_i32_2 = arith.constant 0 : i32
    return %c0_i32, %c0_i32_0, %c0_i32_1 : i32, i32, i32
  }
  func.func @transform_4(%arg0: i32) -> (i32, i32, i32) {
    %c0_i32 = arith.constant 0 : i32
    %c0_i32_0 = arith.constant 0 : i32
    %c0_i32_1 = arith.constant 0 : i32
    %c0_i32_2 = arith.constant 0 : i32
    return %c0_i32, %c0_i32_0, %c0_i32_1 : i32, i32, i32
  }
  func.func @transform_5(%arg0: i32) -> (i32, i32) {
    %c0_i32 = arith.constant 0 : i32
    %c0_i32_0 = arith.constant 0 : i32
    %c0_i32_1 = arith.constant 0 : i32
    return %c0_i32, %c0_i32_0 : i32, i32
  }
  func.func @transform_6(%arg0: i32) -> (i32, i32) {
    %c0_i32 = arith.constant 0 : i32
    %c0_i32_0 = arith.constant 0 : i32
    %c0_i32_1 = arith.constant 0 : i32
    return %c0_i32, %c0_i32_0 : i32, i32
  }
  func.func @transform_7(%arg0: i32) -> (i32, i32) {
    %c0_i32 = arith.constant 0 : i32
    %c0_i32_0 = arith.constant 0 : i32
    return %arg0, %c0_i32 : i32, i32
  }
}

</mosaic_0001>

<llo_original>
// kernel: tpu_custom_call.1
$region0: #{tpu_custom_call.1}
  #allocation0 [shape = 'u32[]', space=smem, size = 0x4, offset = 0x4, fixed_abs, tag = 'smem constant byte address 0x4 - core index']
  #allocation1 [shape = 'u32[72,128]{1,0:T(1,128)}', space=vmem, size = 0x9000, scoped, tag = 'internal scratch']
  %s0 = inlined_call_operand.hbm [shape: f32[8,16], index: 0, kind: input, shape index: {}]
  %s1 = inlined_call_operand.hbm [shape: bf16[16,32], index: 1, kind: input, shape index: {}]
  %s2 = inlined_call_operand.vmem [shape: f32[1,32], index: 2, kind: input, shape index: {}]
  %s3 = inlined_call_operand.hbm [shape: bf16[2,32,32], index: 3, kind: input, shape index: {}]
  %s4 = inlined_call_operand.vmem [shape: f32[2,1,32], index: 4, kind: input, shape index: {}]
  %s5 = inlined_call_operand.hbm [shape: bf16[32,128], index: 5, kind: input, shape index: {}]
  %s6 = inlined_call_operand.vmem [shape: f32[1,128], index: 6, kind: input, shape index: {}]
  %s7 = inlined_call_operand.hbm [shape: f32[8,128], index: 7, kind: output, shape index: {}]
  %s8 = sld [smem:[#allocation0]]
  $region54: #{tpu_custom_call.1} parent=0
    _
  %s10 = ssub.s32 1, %s8
  %s11 = scalar_select 0, %s10, %s8
  $region1: #{tpu_custom_call.1} parent=0
    #allocation2 [shape = 'u8[4096]{0}', space=vmem, size = 0x1000, scoped, tag = 'input window, operand 0, single buffered']
    #allocation3 [shape = 's32[1]{0}', space=sflag, size = 0x4, scoped, tag = 'scoped memory for tpu_custom_call.1']
    #allocation4 [shape = 's32[1]{0}', space=sflag, size = 0x4, scoped, tag = 'scoped memory for tpu_custom_call.1']
    #allocation5 [shape = 'u8[4096]{0}', space=vmem, size = 0x1000, scoped, tag = 'input window, operand 1, single buffered']
    #allocation6 [shape = 's32[1]{0}', space=sflag, size = 0x4, scoped, tag = 'scoped memory for tpu_custom_call.1']
    #allocation7 [shape = 'u8[16384]{0}', space=vmem, size = 0x4000, scoped, tag = 'input window, operand 3, single buffered']
    #allocation8 [shape = 'u8[8192]{0}', space=vmem, size = 0x2000, scoped, tag = 'input window, operand 5, single buffered']
    #allocation9 [shape = 's32[1]{0}', space=sflag, size = 0x4, scoped, tag = 'scoped memory for tpu_custom_call.1']
    #allocation10 [shape = 'u8[4096]{0}', space=vmem, size = 0x1000, scoped, tag = 'output window, operand 0, single buffered']
    %12 = vsyncpa [#allocation3], 0
    %13 = vsyncpa [#allocation6], 0
    %14 = vsyncpa [#allocation9], 0
    %15 = vsyncpa [#allocation4], 0
    // Predicated region
    $region2: #{tpu_custom_call.1} parent=1 // pred_check
      _
    $region3: #{tpu_custom_call.1} parent=1 // pred_check_branch
      %17 = sbr.rel (0) target = $region5
    $region4: #{tpu_custom_call.1} parent=1 // pred_region
      %19 = vsyncadd [#allocation3], 0
      %s21 = sshll.u32 %s0, 4
      %s22 = int_to_ptr.hbm [resolvable:$true] %s21
      %s23 = sshll.u32 [#allocation2], 4
      %s24 = int_to_ptr.vmem [resolvable:$true] %s23
      %26 = dma.hbm_to_vmem [thread:$0]  %s22, 128, %s24, [#allocation3]
    $region5: #{tpu_custom_call.1} parent=1 // pred_fallthru
      _
    // Predicated region
    $region6: #{tpu_custom_call.1} parent=1 // pred_check
      _
    $region7: #{tpu_custom_call.1} parent=1 // pred_check_branch
      %28 = sbr.rel (0) target = $region9
    $region8: #{tpu_custom_call.1} parent=1 // pred_region
      %30 = vsyncadd [#allocation6], 0
      %s31 = sshll.u32 %s1, 4
      %s32 = int_to_ptr.hbm [resolvable:$true] %s31
      %s33 = sshll.u32 [#allocation5], 4
      %s34 = int_to_ptr.vmem [resolvable:$true] %s33
      %39 = dma.hbm_to_vmem [thread:$0]  %s32, 128, %s34, [#allocation6], 64, 64, 4
    $region9: #{tpu_custom_call.1} parent=1 // pred_fallthru
      _
    // Predicated region
    $region10: #{tpu_custom_call.1} parent=1 // pred_check
      _
    $region11: #{tpu_custom_call.1} parent=1 // pred_check_branch
      %41 = sbr.rel (0) target = $region13
    $region12: #{tpu_custom_call.1} parent=1 // pred_region
      _
    $region13: #{tpu_custom_call.1} parent=1 // pred_fallthru
      _
    // Predicated region
    $region14: #{tpu_custom_call.1} parent=1 // pred_check
      _
    $region15: #{tpu_custom_call.1} parent=1 // pred_check_branch
      %43 = sbr.rel (0) target = $region17
    $region16: #{tpu_custom_call.1} parent=1 // pred_region
      %45 = vsyncadd [#allocation6], 0
      %s46 = sshll.u32 %s3, 4
      %s47 = int_to_ptr.hbm [resolvable:$true] %s46
      %s48 = sshll.u32 [#allocation7], 4
      %s49 = int_to_ptr.vmem [resolvable:$true] %s48
      %54 = dma.hbm_to_vmem [thread:$0]  %s47, 512, %s49, [#allocation6], 64, 64, 4
    $region17: #{tpu_custom_call.1} parent=1 // pred_fallthru
      _
    // Predicated region
    $region18: #{tpu_custom_call.1} parent=1 // pred_check
      _
    $region19: #{tpu_custom_call.1} parent=1 // pred_check_branch
      %56 = sbr.rel (0) target = $region21
    $region20: #{tpu_custom_call.1} parent=1 // pred_region
      _
    $region21: #{tpu_custom_call.1} parent=1 // pred_fallthru
      _
    // Predicated region
    $region22: #{tpu_custom_call.1} parent=1 // pred_check
      _
    $region23: #{tpu_custom_call.1} parent=1 // pred_check_branch
      %58 = sbr.rel (0) target = $region25
    $region24: #{tpu_custom_call.1} parent=1 // pred_region
      %60 = vsyncadd [#allocation9], 0
      %s61 = sshll.u32 %s5, 4
      %s62 = int_to_ptr.hbm [resolvable:$true] %s61
      %s63 = sshll.u32 [#allocation8], 4
      %s64 = int_to_ptr.vmem [resolvable:$true] %s63
      %69 = dma.hbm_to_vmem [thread:$0]  %s62, 256, %s64, [#allocation9], 64, 64, 4
    $region25: #{tpu_custom_call.1} parent=1 // pred_fallthru
      _
    // Predicated region
    $region26: #{tpu_custom_call.1} parent=1 // pred_check
      _
    $region27: #{tpu_custom_call.1} parent=1 // pred_check_branch
      %71 = sbr.rel (0) target = $region29
    $region28: #{tpu_custom_call.1} parent=1 // pred_region
      _
    $region29: #{tpu_custom_call.1} parent=1 // pred_fallthru
      _
    // Predicated region
    $region30: #{tpu_custom_call.1} parent=1 // pred_check
      _
    $region31: #{tpu_custom_call.1} parent=1 // pred_check_branch
      %73 = sbr.rel (0) target = $region33
    $region32: #{tpu_custom_call.1} parent=1 // pred_region
      %75 = dma.done [#allocation3], 128
    $region33: #{tpu_custom_call.1} parent=1 // pred_fallthru
      _
    // Predicated region
    $region34: #{tpu_custom_call.1} parent=1 // pred_check
      _
    $region35: #{tpu_custom_call.1} parent=1 // pred_check_branch
      %77 = sbr.rel (0) target = $region37
    $region36: #{tpu_custom_call.1} parent=1 // pred_region
      %79 = dma.done [#allocation6], 128
    $region37: #{tpu_custom_call.1} parent=1 // pred_fallthru
      _
    // Predicated region
    $region38: #{tpu_custom_call.1} parent=1 // pred_check
      _
    $region39: #{tpu_custom_call.1} parent=1 // pred_check_branch
      %81 = sbr.rel (0) target = $region41
    $region40: #{tpu_custom_call.1} parent=1 // pred_region
      %83 = dma.done [#allocation6], 512
    $region41: #{tpu_custom_call.1} parent=1 // pred_fallthru
      _
    // Predicated region
    $region42: #{tpu_custom_call.1} parent=1 // pred_check
      _
    $region43: #{tpu_custom_call.1} parent=1 // pred_check_branch
      %85 = sbr.rel (0) target = $region45
    $region44: #{tpu_custom_call.1} parent=1 // pred_region
      %87 = dma.done [#allocation9], 256
    $region45: #{tpu_custom_call.1} parent=1 // pred_fallthru
      _
    %v89 = vld [vmem:[#allocation2] sm:$0xff]
    %v90 = vmul.f32 %v89, %v89
    %vm91 = vcmask 130048
    %v92 = vsel %vm91, %v90, 0.0
    %93 = vadd.xlane.f32.xlu0 %v92
    %v94 = vpop.xlane.xlu0 %93
    %vm95 = vcmp.gt.f32.partialorder %v94, 0.0
    %v96 = vrsqrt.pop %v94
    %v97 = vmul.f32 %v96, %v94
    %v98 = vmul.f32 %v97, %v96
    %v99 = vmul.f32 0.5, %v98
    %v100 = vsub.f32 1.5, %v99
    %v101 = vmul.f32 %v96, %v100
    %vm102 = vweird.f32 %v94
    %vm103 = vweird.f32 %v96
    %vm104 = vmor %vm102, %vm103
    %v105 = vsel %vm104, %v96, %v101
    %v106 = vsel %vm95, %v105, 1.0
    %v107 = vmul.f32 %v89, %v106
    %v108 = vpack.c.bf16 %v107, %v107
    %v109 = vld [vmem:[#allocation5] sm:$0xf]
    %v110 = vld [vmem:[#allocation5 + $0x4] sm:$0xf]
    %v111 = vld [vmem:[%s2] sm:$0x1]
    %v113 = vperm.slane %v111, 0
    %v117 = vunpack.c.l.b16 %v109
    %v118 = vunpack.c.l.b16 %v110
    %v119 = vpack.c.b16 %v118, %v117
    %v122 = vsel %vm91, %v108, 0
    %124 = vmatpush.bf16.msra.mxu0 0
    %125 = vmatpush.bf16.msra.mxu0 0
    %126 = vmatpush.bf16.msra.mxu0 0
    %127 = vmatpush.bf16.msra.mxu0 0
    %128 = vmatpush.bf16.msra.mxu0 0
    %129 = vmatpush.bf16.msra.mxu0 0
    %130 = vmatpush.bf16.msra.mxu0 0
    %131 = vmatpush.bf16.msra.mxu0 %v119
    %132 = vmatmul.bf16.gmra.mxu0 %v122
    %v133 = vpop.f32.mrf.mxu0
    %v134 = vadd.f32 %v113, %v133
    %v135 = vpop.f32.mrf.mxu0
    %136 = vdwg.mxu0
    %v137 = vxor.u32 %v134, 2147483648
    %v138 = vmul.f32 %v137, 1.442695
    %v139 = vpow.pop %v138
    %v140 = vadd.f32 %v139, 1.0
    %v141 = vrcp.pop %v140
    %v142 = vmul.f32 %v140, %v141
    %v143 = vsub.f32 1.0, %v142
    %v144 = vmul.f32 %v141, %v143
    %v145 = vadd.f32 %v141, %v144
    %vm146 = vweird.f32 %v140
    %vm147 = vweird.f32 %v141
    %vm148 = vmor %vm146, %vm147
    %v149 = vsel %vm148, %v141, %v145
    %v150 = vand.u32 2147483647, %v140
    %vm151 = vcmp.eq.f32.partialorder %v150, 8.507059e+37
    %v152 = vand.u32 %v140, 2147483648
    %v153 = vor.u32 1.1754944e-38, %v152
    %v154 = vsel %vm151, %v153, %v149
    %v155 = vmul.f32 1.0, %v154
    %v156 = vpack.c.bf16 %v155, %v155
    %v157 = vld [vmem:[#allocation7] sm:$0xf]
    %v158 = vld [vmem:[#allocation7 + $0x4] sm:$0xf]
    %v159 = vld [vmem:[#allocation7 + $0x8] sm:$0xf]
    %v160 = vld [vmem:[#allocation7 + $0xc] sm:$0xf]
    %v161 = vld [vmem:[%s4] sm:$0x1]
    %v163 = vperm.slane %v161, 0
    %v169 = vunpack.c.l.b16 %v157
    %v170 = vunpack.c.l.b16 %v158
    %v171 = vunpack.c.l.b16 %v159
    %v172 = vunpack.c.l.b16 %v160
    %v173 = vpack.c.b16 %v170, %v169
    %v174 = vpack.c.b16 %v172, %v171
    %vm177 = vcmask 261120
    %v179 = vsel %vm177, %v156, 0
    %181 = vmatpush.bf16.msra.mxu0 0
    %182 = vmatpush.bf16.msra.mxu0 0
    %183 = vmatpush.bf16.msra.mxu0 0
    %184 = vmatpush.bf16.msra.mxu0 0
    %185 = vmatpush.bf16.msra.mxu0 0
    %186 = vmatpush.bf16.msra.mxu0 0
    %187 = vmatpush.bf16.msra.mxu0 %v174
    %188 = vmatpush.bf16.msra.mxu0 %v173
    %189 = vmatmul.bf16.gmra.mxu0 %v179
    %v190 = vpop.f32.mrf.mxu0
    %v191 = vadd.f32 %v163, %v190
    %v192 = vpop.f32.mrf.mxu0
    %193 = vdwg.mxu0
    %v194 = vxor.u32 %v191, 2147483648
    %v195 = vmul.f32 %v194, 1.442695
    %v196 = vpow.pop %v195
    %v197 = vadd.f32 %v196, 1.0
    %v198 = vrcp.pop %v197
    %v199 = vmul.f32 %v197, %v198
    %v200 = vsub.f32 1.0, %v199
    %v201 = vmul.f32 %v198, %v200
    %v202 = vadd.f32 %v198, %v201
    %vm203 = vweird.f32 %v197
    %vm204 = vweird.f32 %v198
    %vm205 = vmor %vm203, %vm204
    %v206 = vsel %vm205, %v198, %v202
    %v207 = vand.u32 2147483647, %v197
    %vm208 = vcmp.eq.f32.partialorder %v207, 8.507059e+37
    %v209 = vand.u32 %v197, 2147483648
    %v210 = vor.u32 1.1754944e-38, %v209
    %v211 = vsel %vm208, %v210, %v206
    %v212 = vmul.f32 1.0, %v211
    %v213 = vpack.c.bf16 %v212, %v212
    %s214 = scalar_lea.vmem [#allocation7], 16
    %v215 = vld [vmem:[%s214] sm:$0xf]
    %v216 = vld [vmem:[%s214 + $0x4] sm:$0xf]
    %v217 = vld [vmem:[%s214 + $0x8] sm:$0xf]
    %v218 = vld [vmem:[%s214 + $0xc] sm:$0xf]
    %s219 = scalar_lea.vmem %s4, 1
    %v220 = vld [vmem:[%s219] sm:$0x1]
    %v222 = vperm.slane %v220, 0
    %v228 = vunpack.c.l.b16 %v215
    %v229 = vunpack.c.l.b16 %v216
    %v230 = vunpack.c.l.b16 %v217
    %v231 = vunpack.c.l.b16 %v218
    %v232 = vpack.c.b16 %v229, %v228
    %v233 = vpack.c.b16 %v231, %v230
    %v237 = vsel %vm177, %v213, 0
    %239 = vmatpush.bf16.msra.mxu0 0
    %240 = vmatpush.bf16.msra.mxu0 0
    %241 = vmatpush.bf16.msra.mxu0 0
    %242 = vmatpush.bf16.msra.mxu0 0
    %243 = vmatpush.bf16.msra.mxu0 0
    %244 = vmatpush.bf16.msra.mxu0 0
    %245 = vmatpush.bf16.msra.mxu0 %v233
    %246 = vmatpush.bf16.msra.mxu0 %v232
    %247 = vmatmul.bf16.gmra.mxu0 %v237
    %v248 = vpop.f32.mrf.mxu0
    %v249 = vadd.f32 %v222, %v248
    %v250 = vpop.f32.mrf.mxu0
    %251 = vdwg.mxu0
    %v252 = vxor.u32 %v249, 2147483648
    %v253 = vmul.f32 %v252, 1.442695
    %v254 = vpow.pop %v253
    %v255 = vadd.f32 %v254, 1.0
    %v256 = vrcp.pop %v255
    %v257 = vmul.f32 %v255, %v256
    %v258 = vsub.f32 1.0, %v257
    %v259 = vmul.f32 %v256, %v258
    %v260 = vadd.f32 %v256, %v259
    %vm261 = vweird.f32 %v255
    %vm262 = vweird.f32 %v256
    %vm263 = vmor %vm261, %vm262
    %v264 = vsel %vm263, %v256, %v260
    %v265 = vand.u32 2147483647, %v255
    %vm266 = vcmp.eq.f32.partialorder %v265, 8.507059e+37
    %v267 = vand.u32 %v255, 2147483648
    %v268 = vor.u32 1.1754944e-38, %v267
    %v269 = vsel %vm266, %v268, %v264
    %v270 = vmul.f32 1.0, %v269
    %v271 = vpack.c.bf16 %v270, %v270
    %v272 = vld [vmem:[#allocation8] sm:$0xf]
    %v273 = vld [vmem:[#allocation8 + $0x4] sm:$0xf]
    %v274 = vld [vmem:[#allocation8 + $0x8] sm:$0xf]
    %v275 = vld [vmem:[#allocation8 + $0xc] sm:$0xf]
    %v276 = vld [vmem:[%s6] sm:$0x1]
    %v278 = vperm.slane %v276, 0
    %v284 = vunpack.c.l.b16 %v272
    %v285 = vunpack.c.l.b16 %v273
    %v286 = vunpack.c.l.b16 %v274
    %v287 = vunpack.c.l.b16 %v275
    %v288 = vpack.c.b16 %v285, %v284
    %v289 = vpack.c.b16 %v287, %v286
    %v293 = vsel %vm177, %v271, 0
    %295 = vmatpush.bf16.msra.mxu0 0
    %296 = vmatpush.bf16.msra.mxu0 0
    %297 = vmatpush.bf16.msra.mxu0 0
    %298 = vmatpush.bf16.msra.mxu0 0
    %299 = vmatpush.bf16.msra.mxu0 0
    %300 = vmatpush.bf16.msra.mxu0 0
    %301 = vmatpush.bf16.msra.mxu0 %v289
    %302 = vmatpush.bf16.msra.mxu0 %v288
    %303 = vmatmul.bf16.gmra.mxu0 %v293
    %v304 = vpop.f32.mrf.mxu0
    %v305 = vadd.f32 %v278, %v304
    %v306 = vpop.f32.mrf.mxu0
    %307 = vdwg.mxu0
    %308 = vmax.xlane.f32.xlu0 %v305
    %v309 = vpop.xlane.xlu0 %308
    %v310 = vsub.f32 %v305, %v309
    %v311 = vmul.f32 %v310, 1.442695
    %v312 = vpow.pop %v311
    %313 = vadd.xlane.f32.xlu0 %v312
    %v314 = vpop.xlane.xlu0 %313
    %v315 = vlog2.pop %v314
    %v316 = vmul.f32 %v315, 0.6931472
    %v317 = vsub.f32 %v310, %v316
    %318 = vst [vmem:[#allocation10] sm:$0xff] %v317
    // Predicated region
    $region46: #{tpu_custom_call.1} parent=1 // pred_check
      _
    $region47: #{tpu_custom_call.1} parent=1 // pred_check_branch
      %320 = sbr.rel (0) target = $region49
    $region48: #{tpu_custom_call.1} parent=1 // pred_region
      %322 = vsyncadd [#allocation4], 0
      %s324 = sshll.u32 [#allocation10], 4
      %s325 = int_to_ptr.vmem [resolvable:$true] %s324
      %s326 = sshll.u32 %s7, 4
      %s327 = int_to_ptr.hbm [resolvable:$true] %s326
      %329 = dma.vmem_to_hbm [thread:$0]  %s325, 128, %s327, [#allocation4]
    $region49: #{tpu_custom_call.1} parent=1 // pred_fallthru
      _
    // Predicated region
    $region50: #{tpu_custom_call.1} parent=1 // pred_check
      _
    $region51: #{tpu_custom_call.1} parent=1 // pred_check_branch
      %331 = sbr.rel (0) target = $region53
    $region52: #{tpu_custom_call.1} parent=1 // pred_region
      %333 = dma.done [#allocation4], 128
    $region53: #{tpu_custom_call.1} parent=1 // pred_fallthru
      _
    %334 = vsyncpa [#allocation3], 1
    %335 = vsyncpa [#allocation6], 1
    %336 = vsyncpa [#allocation9], 1
    %337 = vsyncpa [#allocation4], 1

</llo_original>
